<compile_context>
chip_gen: v5e
topology: v5e:2x2
jax: 0.10.0
libtpu: 0.0.40
codegen_flags: <defaults>
</compile_context>

<pallas_src>
import math

import jax
import jax.numpy as jnp
from jax import lax
from jax.experimental import pallas as pl
from jax.experimental.pallas import tpu as pltpu

VMEM = pl.BlockSpec(memory_space=pltpu.MemorySpace.VMEM)
SMEM = pl.BlockSpec(memory_space=pltpu.MemorySpace.SMEM)

LEAKY_SLOPE = 0.01   # nn.LeakyReLU default
BN_EPS = 1e-5        # nn.BatchNorm1d default

# Explicit scoped-VMEM limit (review item): default scoped VMEM (16/32 MiB) is
# far below what we may legitimately use once shapes grow; 64 MiB is safe on
# every generation (== v7x physical, < v5e/v6e physical).
VMEM_LIMIT = pltpu.CompilerParams(vmem_limit_bytes=64 * 1024 * 1024)


# --------------------------------------------------------------------------
# EChannelAttn:  y = sigmoid(conv1d_k3(mean_over_C(x)));  out = x * y
# Native NCL layout (B, C, L): L is lane-dense, channel pooling is a cheap
# sublane reduction, the 3-tap conv uses shifted copies of the pooled row.
# TODO(synk): for large L, build the +/-1 shifts with pltpu.roll + an iota
#   boundary mask and tile the kernel over >=512-lane L blocks (1-lane halo).
# --------------------------------------------------------------------------
def eca_kernel(x_ref, w_ref, out_ref):
    B, C, L = x_ref.shape
    x = x_ref[...]
    y = jnp.mean(x, axis=1, keepdims=True)                     # (B, 1, L)
    zcol = jnp.zeros((B, 1, 1), jnp.float32)
    y_prev = jnp.concatenate([zcol, y[:, :, :L - 1]], axis=2)  # y[l-1], 0-pad
    y_next = jnp.concatenate([y[:, :, 1:], zcol], axis=2)      # y[l+1], 0-pad
    conv = w_ref[0] * y_prev + w_ref[1] * y + w_ref[2] * y_next
    attn = jax.nn.sigmoid(conv)                                # (B, 1, L)
    out_ref[...] = x * attn                                    # sublane broadcast over C


def eca_apply(x, w):
    B, C, L = x.shape
    return pl.pallas_call(
        eca_kernel,
        out_shape=jax.ShapeDtypeStruct((B, C, L), jnp.float32),
        in_specs=[VMEM, SMEM],
        out_specs=VMEM,
        compiler_params=VMEM_LIMIT,
    )(x, w)


# --------------------------------------------------------------------------
# Fused bidirectional LSTM layer (PyTorch gate order i, f, g, o), both
# directions in ONE kernel invocation (single-TC friendly).
#
#   x_ref   : (L, B, Din)   time-major input (layer 0: Din = C_in,
#                            deeper layers: Din = 2*Hp with fwd|bwd halves)
#   wih_ref : (Din, 8*Hp)   [fwd i|f|g|o | bwd i|f|g|o], per-gate blocks padded
#                            to Hp lanes, pad columns are zero
#   whh_ref : (2, Hp, 4*Hp) per-direction recurrent weights (padded)
#   b_ref   : (1, 8*Hp)     b_ih + b_hh (padded)
#   out_ref : (L, B, 2*Hp)  forward-time-ordered [h_fwd | h_bwd]
#   mean_ref: (B, 2*Hp)     temporal mean, fused into the recurrence
# --------------------------------------------------------------------------
def bilstm_kernel(x_ref, wih_ref, whh_ref, b_ref, out_ref, mean_ref, xw_scr):
    L, B, Din = x_ref.shape
    Hp = whh_ref.shape[1]            # per-gate (padded) width, multiple of 128
    G = 4 * Hp                       # per-direction gate width

    # ---- input projection for BOTH directions: one (L*B, Din) @ (Din, 2G)
    #      matmul, bf16 operands / f32 accumulation, stored straight into the
    #      time-major scratch (no big live f32 accumulator).
    x2d = x_ref[...].reshape(L * B, Din).astype(jnp.bfloat16)
    wih_bf = wih_ref[...].astype(jnp.bfloat16)
    xw_scr[...] = (jnp.dot(x2d, wih_bf, preferred_element_type=jnp.float32)
                   + b_ref[...]).reshape(L, B, 2 * G)

    whh_f = whh_ref[0].astype(jnp.bfloat16)                    # (Hp, 4Hp)
    whh_b = whh_ref[1].astype(jnp.bfloat16)
    # TODO(synk): hold whh in MXU weight registers across the time loop
    #   (pltpu.matmul_push_rhs / matmul_acc_lhs / matmul_pop) instead of
    #   re-pushing the RHS with jnp.dot every step.
    # TODO(synk): add an L-chunk grid axis (h/c carried in scratch) to bound
    #   VMEM on v7x and overlap the x DMA / output writeback with compute.

    def lstm_cell(gates, c):
        # gate blocks are lane-aligned at offsets 0 / Hp / 2Hp / 3Hp -> free slices
        i_g = jax.nn.sigmoid(gates[:, 0:Hp])
        f_g = jax.nn.sigmoid(gates[:, Hp:2 * Hp])
        g_g = jnp.tanh(gates[:, 2 * Hp:3 * Hp])
        o_g = jax.nn.sigmoid(gates[:, 3 * Hp:4 * Hp])
        c_new = f_g * c + i_g * g_g
        return o_g * jnp.tanh(c_new), c_new

    def step(s, carry):
        h_f, c_f, h_b, c_b, sum_f, sum_b = carry
        t_b = L - 1 - s                                        # in-kernel time reversal
        gates_f = xw_scr[s, :, 0:G] + jnp.dot(
            h_f.astype(jnp.bfloat16), whh_f, preferred_element_type=jnp.float32)
        gates_b = xw_scr[t_b, :, G:2 * G] + jnp.dot(
            h_b.astype(jnp.bfloat16), whh_b, preferred_element_type=jnp.float32)
        h_f, c_f = lstm_cell(gates_f, c_f)
        h_b, c_b = lstm_cell(gates_b, c_b)
        out_ref[s, :, 0:Hp] = h_f                              # lane-dense (B, Hp) store
        out_ref[t_b, :, Hp:2 * Hp] = h_b
        return (h_f, c_f, h_b, c_b, sum_f + h_f, sum_b + h_b)

    z = jnp.zeros((B, Hp), jnp.float32)
    unroll = 4 if L % 4 == 0 else 1
    _, _, _, _, sum_f, sum_b = lax.fori_loop(0, L, step, (z, z, z, z, z, z),
                                             unroll=unroll)
    inv_l = 1.0 / L
    mean_ref[:, 0:Hp] = sum_f * inv_l                          # fused temporal mean
    mean_ref[:, Hp:2 * Hp] = sum_b * inv_l


def bilstm_layer_apply(x_t, wih, whh, b):
    L, B, _ = x_t.shape
    Hp = whh.shape[1]
    return pl.pallas_call(
        bilstm_kernel,
        out_shape=(jax.ShapeDtypeStruct((L, B, 2 * Hp), jnp.float32),
                   jax.ShapeDtypeStruct((B, 2 * Hp), jnp.float32)),
        in_specs=[VMEM, VMEM, VMEM, VMEM],
        out_specs=(VMEM, VMEM),
        scratch_shapes=[pltpu.VMEM((L, B, 8 * Hp), jnp.float32)],
        compiler_params=VMEM_LIMIT,
    )(x_t, wih, whh, b)


# --------------------------------------------------------------------------
# Fused conv path (channels-last inside the kernel):
#   conv1(k3,p1,s1) -> BN -> LeakyReLU -> conv2(k3,p1,s1) -> BN -> LeakyReLU
#   -> +residual -> downconv3(k3,p1,s2) -> BN -> LeakyReLU
# Small-C regime: each conv is a sum of 3*C VPU tap-shift multiply-adds (no
# im2col concat/reshape, no under-filled MXU matmuls).  The padded scratch's
# halo rows are zeroed once; the stride-2 conv reads its taps with stride-2
# pl.ds slices and only computes the even output positions.
# TODO(synk): for C >= 128 switch back to an im2col matmul with the taps staged
#   into a persistent (B, n, 3C) scratch; for long L tile over L with a
#   two-pass BN (v7x VMEM).
# --------------------------------------------------------------------------
def conv_block_kernel(z_ref, w1_ref, b1_ref, g1_ref, be1_ref,
                      w2_ref, b2_ref, g2_ref, be2_ref,
                      w3_ref, b3_ref, g3_ref, be3_ref,
                      out_ref, pad_scr):
    B, L, C = z_ref.shape
    outL, Cout = out_ref.shape[1], out_ref.shape[2]

    # Zero only the two halo rows once; interior rows (1..L) are fully
    # overwritten before every conv.
    pad_scr[:, 0:1, :] = jnp.zeros((B, 1, C), jnp.float32)
    pad_scr[:, L + 1:L + 2, :] = jnp.zeros((B, 1, C), jnp.float32)

    def conv3(act, w_ref_, b_ref_, stride):
        # act: (B, L, C) f32; w_ref_: (3C, co) with row = k*C + ci; b_ref_: (1, co)
        pad_scr[:, 1:L + 1, :] = act
        if stride == 1:
            n = L
            taps = [pad_scr[:, dk:dk + L, :] for dk in range(3)]
        else:  # stride 2: only even output positions are computed
            n = outL
            taps = [pad_scr[:, pl.ds(dk, outL, 2), :] for dk in range(3)]
        M = B * n
        y = None
        for k in range(3):                                     # static tap loop (VPU)
            tap2d = taps[k].reshape(M, C)
            for ci in range(C):                                # static channel loop
                row = k * C + ci
                term = tap2d[:, ci:ci + 1] * w_ref_[row:row + 1, :]
                y = term if y is None else y + term
        return y + b_ref_[...]                                 # (M, co)

    def bn_leaky(a, gamma_ref, beta_ref):
        # training-mode BatchNorm1d (batch statistics, biased variance) + LeakyReLU
        mean = jnp.mean(a, axis=0, keepdims=True)
        var = jnp.mean(jnp.square(a - mean), axis=0, keepdims=True)
        y = (a - mean) * lax.rsqrt(var + BN_EPS) * gamma_ref[...] + beta_ref[...]
        return jnp.where(y >= 0, y, LEAKY_SLOPE * y)

    z = z_ref[...]                                             # (B, L, C)
    x1 = bn_leaky(conv3(z, w1_ref, b1_ref, 1), g1_ref, be1_ref)               # (B*L, C)
    x2 = bn_leaky(conv3(x1.reshape(B, L, C), w2_ref, b2_ref, 1), g2_ref, be2_ref)
    x2 = x2 + z.reshape(B * L, C)                                             # residual
    x3 = bn_leaky(conv3(x2.reshape(B, L, C), w3_ref, b3_ref, 2), g3_ref, be3_ref)
    out_ref[...] = x3.reshape(B, outL, Cout)


def conv_block_apply(z, cp):
    B, L, C = z.shape
    Cout = cp["w3"].shape[1]
    outL = (L - 1) // 2 + 1
    return pl.pallas_call(
        conv_block_kernel,
        out_shape=jax.ShapeDtypeStruct((B, outL, Cout), jnp.float32),
        in_specs=[VMEM] * 13,
        out_specs=VMEM,
        scratch_shapes=[pltpu.VMEM((B, L + 2, C), jnp.float32)],
        compiler_params=VMEM_LIMIT,
    )(z, cp["w1"], cp["b1"], cp["g1"], cp["be1"],
      cp["w2"], cp["b2"], cp["g2"], cp["be2"],
      cp["w3"], cp["b3"], cp["g3"], cp["be3"])


# --------------------------------------------------------------------------
# Parameter init (deterministic, PyTorch-style uniform ranges), pre-laid-out
# for the kernels:
#   * LSTM weights are transposed to (Din, 4H), the i/f/g/o blocks are placed
#     at 128-lane-aligned offsets (per-gate width padded to Hp, pad columns and
#     biases zero), the two directions are concatenated along N, and for
#     deeper layers the input rows are expanded to the padded fwd|bwd layout.
#   * Conv weights are reshaped to (3*Cin, Cout) with rows ordered k*Cin + ci.
# --------------------------------------------------------------------------
def _round_up(x, m):
    return ((x + m - 1) // m) * m


def init_params(key, c_in, c_out, hidden, num_layers):
    keys = iter(jax.random.split(key, 128))

    def u(shape, scale):
        return jax.random.uniform(next(keys), shape, jnp.float32, -scale, scale)

    Hp = _round_up(hidden, 128)
    params = {"eca_w": u((3,), 1.0 / math.sqrt(3.0)),
              "hidden": hidden, "hidden_pad": Hp}

    def place_gate_cols(w_t):                                  # (rows, 4H) -> (rows, 4Hp)
        out = jnp.zeros((w_t.shape[0], 4 * Hp), jnp.float32)
        for g in range(4):
            out = out.at[:, g * Hp:g * Hp + hidden].set(
                w_t[:, g * hidden:(g + 1) * hidden])
        return out

    lstm = []
    for layer in range(num_layers):
        din = c_in if layer == 0 else 2 * hidden
        sc = 1.0 / math.sqrt(hidden)
        wih_dirs, whh_dirs, b_dirs = [], [], []
        for _ in range(2):                                     # fwd, bwd
            w_ih = u((4 * hidden, din), sc)                    # torch layout (4H, Din)
            w_hh = u((4 * hidden, hidden), sc)                 # torch layout (4H, H)
            b = u((4 * hidden,), sc) + u((4 * hidden,), sc)    # b_ih + b_hh

            w_ih_p = place_gate_cols(jnp.transpose(w_ih))      # (Din, 4Hp)
            if layer > 0:
                # input rows: [0:H] <- fwd half of prev layer, [Hp:Hp+H] <- bwd half
                full = jnp.zeros((2 * Hp, 4 * Hp), jnp.float32)
                full = full.at[0:hidden].set(w_ih_p[0:hidden])
                full = full.at[Hp:Hp + hidden].set(w_ih_p[hidden:2 * hidden])
                w_ih_p = full
            wih_dirs.append(w_ih_p)

            w_hh_p = place_gate_cols(jnp.transpose(w_hh))      # (H, 4Hp)
            w_hh_p = jnp.zeros((Hp, 4 * Hp), jnp.float32).at[0:hidden].set(w_hh_p)
            whh_dirs.append(w_hh_p)

            b_dirs.append(place_gate_cols(b.reshape(1, 4 * hidden)))   # (1, 4Hp)

        lstm.append({"wih": jnp.concatenate(wih_dirs, axis=1),  # (Din_p, 8Hp) [fwd|bwd]
                     "whh": jnp.stack(whh_dirs),                # (2, Hp, 4Hp)
                     "b": jnp.concatenate(b_dirs, axis=1)})     # (1, 8Hp)
    params["lstm"] = lstm

    def conv_init(cin, cout, k):
        sc = 1.0 / math.sqrt(cin * k)
        w = u((cout, cin, k), sc)                               # torch layout (Cout, Cin, K)
        b = u((cout,), sc)
        w2d = jnp.transpose(w, (2, 1, 0)).reshape(k * cin, cout)  # rows = k*Cin + ci
        return w2d, b.reshape(1, cout)

    conv = {}
    conv["w1"], conv["b1"] = conv_init(c_in, c_in, 3)
    conv["g1"], conv["be1"] = jnp.ones((1, c_in)), jnp.zeros((1, c_in))
    conv["w2"], conv["b2"] = conv_init(c_in, c_in, 3)
    conv["g2"], conv["be2"] = jnp.ones((1, c_in)), jnp.zeros((1, c_in))
    conv["w3"], conv["b3"] = conv_init(c_in, c_out, 3)
    conv["g3"], conv["be3"] = jnp.ones((1, c_out)), jnp.zeros((1, c_out))
    params["conv"] = conv
    return params


# --------------------------------------------------------------------------
# ScaleLayer.forward
# --------------------------------------------------------------------------
def scale_layer_forward(x, params, use_attn=True):
    # x: (B, C, L) like PyTorch (batch, feature, seq)
    x = x.astype(jnp.float32)
    if use_attn:
        x = eca_apply(x, params["eca_w"])                      # (B, C, L)

    # ----- LSTM path: time-major, fused bidirectional layers; each layer emits
    #       a single (L, B, 2*Hp) fwd|bwd buffer consumed directly by the next.
    H, Hp = params["hidden"], params["hidden_pad"]
    h = jnp.transpose(x, (2, 0, 1))                            # (L, B, C)
    mean = None
    for lp in params["lstm"]:
        h, mean = bilstm_layer_apply(h, lp["wih"], lp["whh"], lp["b"])
    lstmy = jnp.concatenate([mean[:, :H], mean[:, Hp:Hp + H]], axis=-1)  # (B, 2H)

    # ----- Conv path (channels-last inside the kernel)
    z = jnp.transpose(x, (0, 2, 1))                            # (B, L, C)
    conv_cl = conv_block_apply(z, params["conv"])              # (B, outL, Cout)
    convy = jnp.transpose(conv_cl, (0, 2, 1))                  # (B, Cout, outL) NCL
    return convy, lstmy


if __name__ == "__main__":
    B, C_IN, C_OUT, L, HIDDEN, LAYERS = 2, 4, 8, 16, 16, 2

    key = jax.random.PRNGKey(0)
    pkey, xkey = jax.random.split(key)
    params = init_params(pkey, C_IN, C_OUT, HIDDEN, LAYERS)
    x = jax.random.normal(xkey, (B, C_IN, L), jnp.float32)

    convy, lstmy = scale_layer_forward(x, params, use_attn=True)
    jax.block_until_ready((convy, lstmy))

    assert convy.shape == (B, C_OUT, (L - 1) // 2 + 1), convy.shape
    assert lstmy.shape == (B, 2 * HIDDEN), lstmy.shape
    assert bool(jnp.all(jnp.isfinite(convy))) and bool(jnp.all(jnp.isfinite(lstmy)))
    print("KERNEL_OK")
</pallas_src>

<mosaic_0001>
module attributes {stable_mosaic.version = 11 : i64} {
  func.func @eca_kernel(%arg0: memref<2x4x16xf32, #tpu.memory_space<vmem>>, %arg1: memref<3xf32, #tpu.memory_space<smem>>, %arg2: memref<2x4x16xf32, #tpu.memory_space<vmem>>) attributes {dimension_semantics = [], scalar_prefetch = 0 : i64, scratch_operands = 0 : i64, tpu.core_type = #tpu.core_type<tc>} {
    %c0 = arith.constant 0 : index
    %c0_0 = arith.constant 0 : index
    %c0_1 = arith.constant 0 : index
    %0 = vector.load %arg0[%c0, %c0_0, %c0_1] : memref<2x4x16xf32, #tpu.memory_space<vmem>>, vector<2x4x16xf32>
    %cst = arith.constant dense<0.000000e+00> : vector<2x16xf32>
    %1 = vector.multi_reduction <add>, %0, %cst [1] : vector<2x4x16xf32> to vector<2x16xf32>
    %2 = vector.shape_cast %1 : vector<2x16xf32> to vector<2x1x16xf32>
    %cst_2 = arith.constant 4.000000e+00 : f32
    %3 = vector.broadcast %cst_2 : f32 to vector<2x1x16xf32>
    %4 = arith.divf %2, %3 : vector<2x1x16xf32>
    %cst_3 = arith.constant 0.000000e+00 : f32
    %5 = vector.broadcast %cst_3 : f32 to vector<2x1x1xf32>
    %6 = vector.extract_strided_slice %4 {offsets = [0, 0, 0], sizes = [2, 1, 15], strides = [1, 1, 1]} : vector<2x1x16xf32> to vector<2x1x15xf32>
    %7 = tpu.concatenate %5, %6 in 2 : vector<2x1x1xf32>, vector<2x1x15xf32> -> vector<2x1x16xf32>
    %8 = vector.extract_strided_slice %4 {offsets = [0, 0, 1], sizes = [2, 1, 15], strides = [1, 1, 1]} : vector<2x1x16xf32> to vector<2x1x15xf32>
    %9 = tpu.concatenate %8, %5 in 2 : vector<2x1x15xf32>, vector<2x1x1xf32> -> vector<2x1x16xf32>
    %c0_4 = arith.constant 0 : index
    %10 = memref.load %arg1[%c0_4] : memref<3xf32, #tpu.memory_space<smem>>
    %11 = vector.broadcast %10 : f32 to vector<2x1x16xf32>
    %12 = arith.mulf %11, %7 : vector<2x1x16xf32>
    %c1 = arith.constant 1 : index
    %13 = memref.load %arg1[%c1] : memref<3xf32, #tpu.memory_space<smem>>
    %14 = vector.broadcast %13 : f32 to vector<2x1x16xf32>
    %15 = arith.mulf %14, %4 : vector<2x1x16xf32>
    %16 = arith.addf %12, %15 : vector<2x1x16xf32>
    %c2 = arith.constant 2 : index
    %17 = memref.load %arg1[%c2] : memref<3xf32, #tpu.memory_space<smem>>
    %18 = vector.broadcast %17 : f32 to vector<2x1x16xf32>
    %19 = arith.mulf %18, %9 : vector<2x1x16xf32>
    %20 = arith.addf %16, %19 : vector<2x1x16xf32>
    %21 = arith.negf %20 : vector<2x1x16xf32>
    %22 = math.exp %21 : vector<2x1x16xf32>
    %cst_5 = arith.constant 1.000000e+00 : f32
    %23 = vector.broadcast %cst_5 : f32 to vector<2x1x16xf32>
    %24 = arith.addf %23, %22 : vector<2x1x16xf32>
    %25 = arith.divf %23, %24 : vector<2x1x16xf32>
    %26 = vector.broadcast %25 : vector<2x1x16xf32> to vector<2x4x16xf32>
    %27 = arith.mulf %0, %26 : vector<2x4x16xf32>
    %c0_6 = arith.constant 0 : index
    %c0_7 = arith.constant 0 : index
    %c0_8 = arith.constant 0 : index
    %28 = vector.load %arg2[%c0_6, %c0_7, %c0_8] : memref<2x4x16xf32, #tpu.memory_space<vmem>>, vector<2x4x16xf32>
    tpu.vector_store %arg2[%c0_6, %c0_7, %c0_8], %27 {strides = array<i32>} : memref<2x4x16xf32, #tpu.memory_space<vmem>>, vector<2x4x16xf32>,
    return
  }
}

</mosaic_0001>

<llo_original>
// kernel: tpu_custom_call.1
$region0: #{tpu_custom_call.1}
  #allocation0 [shape = 'u32[]', space=smem, size = 0x4, offset = 0x4, fixed_abs, tag = 'smem constant byte address 0x4 - core index']
  #allocation1 [shape = 'u32[72,128]{1,0:T(1,128)}', space=vmem, size = 0x9000, scoped, tag = 'internal scratch']
  %s0 = inlined_call_operand.hbm [shape: f32[2,4,16], index: 0, kind: input, shape index: {}]
  %s1 = inlined_call_operand.hbm [shape: f32[3], index: 1, kind: input, shape index: {}]
  %s2 = inlined_call_operand.hbm [shape: f32[2,4,16], index: 2, kind: output, shape index: {}]
  %s3 = sld [smem:[#allocation0]]
  $region26: #{tpu_custom_call.1} parent=0
    _
  %s5 = ssub.s32 1, %s3
  %s6 = scalar_select 0, %s5, %s3
  $region1: #{tpu_custom_call.1} parent=0
    #allocation2 [shape = 'u8[4096]{0}', space=vmem, size = 0x1000, scoped, tag = 'input window, operand 0, single buffered']
    #allocation3 [shape = 's32[1]{0}', space=sflag, size = 0x4, scoped, tag = 'scoped memory for tpu_custom_call.1']
    #allocation4 [shape = 's32[1]{0}', space=sflag, size = 0x4, scoped, tag = 'scoped memory for tpu_custom_call.1']
    #allocation5 [shape = 's32[1]{0}', space=sflag, size = 0x4, scoped, tag = 'scoped memory for tpu_custom_call.1']
    #allocation6 [shape = 'u8[512]{0}', space=smem, size = 0x200, scoped, tag = 'input window, operand 1, single buffered']
    #allocation7 [shape = 'u8[4096]{0}', space=vmem, size = 0x1000, scoped, tag = 'output window, operand 0, single buffered']
    %7 = vsyncpa [#allocation3], 0
    %8 = vsyncpa [#allocation5], 0
    %9 = vsyncpa [#allocation4], 0
    // Predicated region
    $region2: #{tpu_custom_call.1} parent=1 // pred_check
      _
    $region3: #{tpu_custom_call.1} parent=1 // pred_check_branch
      %11 = sbr.rel (0) target = $region5
    $region4: #{tpu_custom_call.1} parent=1 // pred_region
      %13 = vsyncadd [#allocation3], 0
      %s14 = sshll.u32 %s0, 4
      %s15 = int_to_ptr.hbm [resolvable:$true] %s14
      %s16 = sshll.u32 [#allocation2], 4
      %s17 = int_to_ptr.vmem [resolvable:$true] %s16
      %22 = dma.hbm_to_vmem [thread:$0]  %s15, 128, %s17, [#allocation3], 64, 64, 4
    $region5: #{tpu_custom_call.1} parent=1 // pred_fallthru
      _
    // Predicated region
    $region6: #{tpu_custom_call.1} parent=1 // pred_check
      _
    $region7: #{tpu_custom_call.1} parent=1 // pred_check_branch
      %24 = sbr.rel (0) target = $region9
    $region8: #{tpu_custom_call.1} parent=1 // pred_region
      %26 = vsyncadd [#allocation5], 0
      %s28 = sshll.u32 %s1, 4
      %s29 = int_to_ptr.hbm [resolvable:$true] %s28
      %31 = dma.hbm_to_smem %s29, 16, [#allocation6], [#allocation5]
    $region9: #{tpu_custom_call.1} parent=1 // pred_fallthru
      _
    // Predicated region
    $region10: #{tpu_custom_call.1} parent=1 // pred_check
      _
    $region11: #{tpu_custom_call.1} parent=1 // pred_check_branch
      %33 = sbr.rel (0) target = $region13
    $region12: #{tpu_custom_call.1} parent=1 // pred_region
      %35 = dma.done [#allocation3], 128
    $region13: #{tpu_custom_call.1} parent=1 // pred_fallthru
      _
    // Predicated region
    $region14: #{tpu_custom_call.1} parent=1 // pred_check
      _
    $region15: #{tpu_custom_call.1} parent=1 // pred_check_branch
      %37 = sbr.rel (0) target = $region17
    $region16: #{tpu_custom_call.1} parent=1 // pred_region
      %39 = dma.done [#allocation5], 16
    $region17: #{tpu_custom_call.1} parent=1 // pred_fallthru
      _
    %40 = sfence
    %v41 = vld [vmem:[#allocation2] sm:$0xf]
    %v42 = vld [vmem:[#allocation2 + $0x4] sm:$0xf]
    %vm43 = vcmask 125952
    %v44 = vsel %vm43, %v41, 0.0
    %v45 = vrot.slane %v44, 4
    %v46 = vadd.f32 %v44, %v45
    %v47 = vrot.slane %v46, 2
    %v48 = vadd.f32 %v46, %v47
    %v49 = vrot.slane %v48, 1
    %v50 = vadd.f32 %v48, %v49
    %v51 = vsel %vm43, %v42, 0.0
    %v52 = vrot.slane %v51, 4
    %v53 = vadd.f32 %v51, %v52
    %v54 = vrot.slane %v53, 2
    %v55 = vadd.f32 %v53, %v54
    %v56 = vrot.slane %v55, 1
    %v57 = vadd.f32 %v55, %v56
    %v58 = vrcp.pop 4.0
    %v59 = vmul.f32 4.0, %v58
    %v60 = vsub.f32 1.0, %v59
    %v61 = vmul.f32 %v58, %v60
    %v62 = vadd.f32 %v58, %v61
    %vm63 = vweird.f32 %v58
    %v64 = vsel %vm63, %v58, %v62
    %v65 = vmul.f32 %v50, %v64
    %v66 = vmul.f32 %v57, %v64
    %69 = vrot.lane.b32.xlu0 %v65, 1
    %v70 = vpop.permute.xlu0 %69
    %71 = vrot.lane.b32.xlu0 %v66, 1
    %v72 = vpop.permute.xlu0 %71
    %vm75 = vcmask 7168
    %v76 = vsel %vm75, 0.0, %v70
    %v77 = vsel %vm75, 0.0, %v72
    %78 = vrot.lane.b32.xlu0 %v65, 127
    %v79 = vpop.permute.xlu0 %78
    %80 = vrot.lane.b32.xlu0 %v66, 127
    %v81 = vpop.permute.xlu0 %80
    %vm84 = vcmask 121856
    %v85 = vsel %vm84, %v79, 0.0
    %v86 = vsel %vm84, %v81, 0.0
    %s87 = sld [smem:[#allocation6]]
    %v88 = vstv %s87
    %v89 = vmul.f32 %v88, %v76
    %v90 = vmul.f32 %v88, %v77
    %s91 = sld [smem:[#allocation6 + $0x1]]
    %v92 = vstv %s91
    %v93 = vmul.f32 %v92, %v65
    %v94 = vmul.f32 %v92, %v66
    %v95 = vadd.f32 %v89, %v93
    %v96 = vadd.f32 %v90, %v94
    %s97 = sld [smem:[#allocation6 + $0x2]]
    %v98 = vstv %s97
    %v99 = vmul.f32 %v98, %v85
    %v100 = vmul.f32 %v98, %v86
    %v101 = vadd.f32 %v95, %v99
    %v102 = vadd.f32 %v96, %v100
    %v103 = vxor.u32 %v101, 2147483648
    %v104 = vxor.u32 %v102, 2147483648
    %v105 = vmul.f32 %v103, 1.442695
    %v106 = vpow.pop %v105
    %v107 = vmul.f32 %v104, 1.442695
    %v108 = vpow.pop %v107
    %v109 = vadd.f32 %v106, 1.0
    %v110 = vadd.f32 %v108, 1.0
    %v111 = vrcp.pop %v109
    %v112 = vmul.f32 %v109, %v111
    %v113 = vsub.f32 1.0, %v112
    %v114 = vmul.f32 %v111, %v113
    %v115 = vadd.f32 %v111, %v114
    %vm116 = vweird.f32 %v109
    %vm117 = vweird.f32 %v111
    %vm118 = vmor %vm116, %vm117
    %v119 = vsel %vm118, %v111, %v115
    %v120 = vand.u32 2147483647, %v109
    %vm121 = vcmp.eq.f32.partialorder %v120, 8.507059e+37
    %v122 = vand.u32 %v109, 2147483648
    %v123 = vor.u32 1.1754944e-38, %v122
    %v124 = vsel %vm121, %v123, %v119
    %v125 = vmul.f32 1.0, %v124
    %v126 = vrcp.pop %v110
    %v127 = vmul.f32 %v110, %v126
    %v128 = vsub.f32 1.0, %v127
    %v129 = vmul.f32 %v126, %v128
    %v130 = vadd.f32 %v126, %v129
    %vm131 = vweird.f32 %v110
    %vm132 = vweird.f32 %v126
    %vm133 = vmor %vm131, %vm132
    %v134 = vsel %vm133, %v126, %v130
    %v135 = vand.u32 2147483647, %v110
    %vm136 = vcmp.eq.f32.partialorder %v135, 8.507059e+37
    %v137 = vand.u32 %v110, 2147483648
    %v138 = vor.u32 1.1754944e-38, %v137
    %v139 = vsel %vm136, %v138, %v134
    %v140 = vmul.f32 1.0, %v139
    %v141 = vperm.slane %v125, 0
    %v142 = vperm.slane %v140, 0
    %v143 = vmul.f32 %v41, %v141
    %v144 = vmul.f32 %v42, %v142
    %145 = vst.msk [vmem:[#allocation7] sm:$0xf] %vm43, %v143
    %146 = vst.msk [vmem:[#allocation7 + $0x4] sm:$0xf] %vm43, %v144
    // Predicated region
    $region18: #{tpu_custom_call.1} parent=1 // pred_check
      _
    $region19: #{tpu_custom_call.1} parent=1 // pred_check_branch
      %148 = sbr.rel (0) target = $region21
    $region20: #{tpu_custom_call.1} parent=1 // pred_region
      %150 = vsyncadd [#allocation4], 0
      %s151 = sshll.u32 [#allocation7], 4
      %s152 = int_to_ptr.vmem [resolvable:$true] %s151
      %s153 = sshll.u32 %s2, 4
      %s154 = int_to_ptr.hbm [resolvable:$true] %s153
      %159 = dma.vmem_to_hbm [thread:$0]  %s152, 128, %s154, [#allocation4], 64, 64, 4
    $region21: #{tpu_custom_call.1} parent=1 // pred_fallthru
      _
    // Predicated region
    $region22: #{tpu_custom_call.1} parent=1 // pred_check
      _
    $region23: #{tpu_custom_call.1} parent=1 // pred_check_branch
      %161 = sbr.rel (0) target = $region25
    $region24: #{tpu_custom_call.1} parent=1 // pred_region
      %163 = dma.done [#allocation4], 128
    $region25: #{tpu_custom_call.1} parent=1 // pred_fallthru
      _
    %164 = vsyncpa [#allocation3], 1
    %165 = vsyncpa [#allocation4], 1
    %166 = vsyncpa [#allocation5], 1

</llo_original>
